<compile_context>
chip_gen: v6e
topology: v6e:2x2x1
jax: 0.10.0
libtpu: 0.0.40
codegen_flags: <defaults>
</compile_context>

<pallas_src>
import functools

import jax
import jax.numpy as jnp
from jax.experimental import pallas as pl
from jax.experimental.pallas import tpu as pltpu

_LANE = 128
_SUBLANE = 8


def _soft_xent_kernel(x_ref, t_ref, o_ref, acc_ref, *, num_classes):
    i = pl.program_id(1)

    @pl.when(i == 0)
    def _():
        acc_ref[...] = jnp.zeros_like(acc_ref)

    x = x_ref[...].astype(jnp.float32)
    t = t_ref[...].astype(jnp.float32)

    eps = jnp.float32(1e-8)
    # log(softmax(log(x+eps))) = log(x+eps) - log(sum_classes(x+eps))
    z = jnp.log(x + eps)                                   # 1 log / element (EUP)
    # Padded class lanes hold x == 0, so add the exact num_classes * eps term.
    row_sum = jnp.sum(x, axis=1, keepdims=True) + jnp.float32(num_classes) * eps
    lse = jnp.log(row_sum)                                 # 1 log / row (cheap)
    # -t * log(p) = t * (lse - z); padded lanes / padded rows have t == 0.
    acc_ref[...] += t * (lse - z)                          # pure VPU adds per step

    @pl.when(i == pl.num_programs(1) - 1)
    def _():
        # Single cross-lane reduction in the epilogue only.
        total = jnp.sum(acc_ref[...])
        o_ref[...] = jnp.broadcast_to(total, o_ref.shape)


def soft_cross_entropy_v2(inputs, soft_target, *, num_core_splits=2, max_row_tile=1024):
    """inputs, soft_target: (N, C) arrays. Returns scalar loss (float32)."""
    assert inputs.shape == soft_target.shape
    n, c = inputs.shape

    # Lane-dense class axis.
    c_pad = max(_LANE, ((c + _LANE - 1) // _LANE) * _LANE)

    # Largest row tile that keeps
    #   (2 inputs x 2 pipeline buffers + 1 f32 accumulator) x row_tile x c_pad x 4B
    # under ~20 MiB (headroom for v7x's 64 MiB physical / 32 MiB scoped VMEM).
    budget_bytes = 20 * 1024 * 1024
    row_tile = budget_bytes // (5 * c_pad * 4)
    row_tile = min(row_tile, max_row_tile)
    rows_per_core = -(-n // num_core_splits)
    row_tile = min(row_tile, ((rows_per_core + _SUBLANE - 1) // _SUBLANE) * _SUBLANE)
    row_tile = max(_SUBLANE, (row_tile // _SUBLANE) * _SUBLANE)

    tiles_per_core = -(-n // (num_core_splits * row_tile))
    n_pad = num_core_splits * tiles_per_core * row_tile

    # Zero padding: padded soft_target rows/cols are 0 -> contribute exactly 0.
    x = jnp.pad(inputs, ((0, n_pad - n), (0, c_pad - c)))
    t = jnp.pad(soft_target, ((0, n_pad - n), (0, c_pad - c)))

    grid = (num_core_splits, tiles_per_core)
    kernel = functools.partial(_soft_xent_kernel, num_classes=c)

    row_block_idx = lambda core, i: (core * tiles_per_core + i, 0)

    partials = pl.pallas_call(
        kernel,
        out_shape=jax.ShapeDtypeStruct((num_core_splits, _SUBLANE, _LANE), jnp.float32),
        grid_spec=pltpu.PrefetchScalarGridSpec(
            num_scalar_prefetch=0,
            grid=grid,
            in_specs=[
                pl.BlockSpec((row_tile, c_pad), row_block_idx),
                pl.BlockSpec((row_tile, c_pad), row_block_idx),
            ],
            out_specs=pl.BlockSpec((1, _SUBLANE, _LANE), lambda core, i: (core, 0, 0)),
            scratch_shapes=[pltpu.VMEM((row_tile, c_pad), jnp.float32)],
        ),
        compiler_params=pltpu.CompilerParams(
            dimension_semantics=("parallel", "arbitrary"),
            vmem_limit_bytes=32 * 1024 * 1024,
        ),
    )(x, t)

    # Each core's partial lives at [core, 0, 0]; divide by the TRUE batch size.
    return jnp.sum(partials[:, 0, 0]) / jnp.float32(n)


def _reference(inputs, soft_target):
    z = jnp.log(inputs.astype(jnp.float32) + 1e-8)
    p = jax.nn.softmax(z, axis=1)
    ce = -soft_target.astype(jnp.float32) * jnp.log(p)
    return jnp.mean(jnp.sum(ce, axis=1))


if __name__ == "__main__":
    key = jax.random.PRNGKey(0)
    k1, k2 = jax.random.split(key)

    N, C = 16, 32
    # predictions: positive values (module takes log of them directly)
    inputs = jax.random.uniform(k1, (N, C), dtype=jnp.float32, minval=0.05, maxval=1.0)
    # soft targets: a valid probability distribution per row
    soft_target = jax.nn.softmax(jax.random.normal(k2, (N, C), dtype=jnp.float32), axis=1)

    loss = soft_cross_entropy_v2(inputs, soft_target)
    jax.block_until_ready(loss)

    ref = _reference(inputs, soft_target)
    assert jnp.allclose(loss, ref, rtol=1e-5, atol=1e-5), (loss, ref)

    print("KERNEL_OK")
</pallas_src>

<mosaic_0001>
module attributes {stable_mosaic.version = 11 : i64} {
  func.func @_soft_xent_kernel(%arg0: i32, %arg1: i32, %arg2: memref<8x128xf32, #tpu.memory_space<vmem>>, %arg3: memref<8x128xf32, #tpu.memory_space<vmem>>, %arg4: memref<1x8x128xf32, #tpu.memory_space<vmem>>, %arg5: memref<8x128xf32, #tpu.memory_space<vmem>>) attributes {dimension_semantics = [#tpu.dimension_semantics<parallel>, #tpu.dimension_semantics<arbitrary>], iteration_bounds = array<i64: 2, 1>, scalar_prefetch = 0 : i64, scratch_operands = 1 : i64, tpu.core_type = #tpu.core_type<tc>, window_params = [{transform_indices = @transform_0, window_bounds = array<i64: 8, 128>}, {transform_indices = @transform_1, window_bounds = array<i64: 8, 128>}, {transform_indices = @transform_2, window_bounds = array<i64: 1, 8, 128>}]} {
    %c0_i32 = arith.constant 0 : i32
    %0 = arith.cmpi eq, %arg1, %c0_i32 : i32
    %1 = arith.extui %0 : i1 to i32
    %c0_i32_0 = arith.constant 0 : i32
    %2 = arith.cmpi ne, %1, %c0_i32_0 : i32
    scf.if %2 {
      %cst_13 = arith.constant 0.000000e+00 : f32
      %23 = vector.broadcast %cst_13 : f32 to vector<8x128xf32>
      %c0_14 = arith.constant 0 : index
      %c0_15 = arith.constant 0 : index
      %24 = vector.load %arg5[%c0_14, %c0_15] : memref<8x128xf32, #tpu.memory_space<vmem>>, vector<8x128xf32>
      tpu.vector_store %arg5[%c0_14, %c0_15], %23 {strides = array<i32>} : memref<8x128xf32, #tpu.memory_space<vmem>>, vector<8x128xf32>,
    } else {
    }
    %c0 = arith.constant 0 : index
    %c0_1 = arith.constant 0 : index
    %3 = vector.load %arg2[%c0, %c0_1] : memref<8x128xf32, #tpu.memory_space<vmem>>, vector<8x128xf32>
    %c0_2 = arith.constant 0 : index
    %c0_3 = arith.constant 0 : index
    %4 = vector.load %arg3[%c0_2, %c0_3] : memref<8x128xf32, #tpu.memory_space<vmem>>, vector<8x128xf32>
    %cst = arith.constant 9.99999993E-9 : f32
    %5 = vector.broadcast %cst : f32 to vector<8x128xf32>
    %6 = arith.addf %3, %5 : vector<8x128xf32>
    %7 = math.log %6 : vector<8x128xf32>
    %cst_4 = arith.constant dense<0.000000e+00> : vector<8xf32>
    %8 = vector.multi_reduction <add>, %3, %cst_4 [1] : vector<8x128xf32> to vector<8xf32>
    %9 = vector.shape_cast %8 : vector<8xf32> to vector<8x1xf32>
    %cst_5 = arith.constant 3.200000e+01 : f32
    %cst_6 = arith.constant 9.99999993E-9 : f32
    %10 = arith.mulf %cst_5, %cst_6 : f32
    %11 = vector.broadcast %10 : f32 to vector<8x1xf32>
    %12 = arith.addf %9, %11 : vector<8x1xf32>
    %13 = math.log %12 : vector<8x1xf32>
    %c0_7 = arith.constant 0 : index
    %c0_8 = arith.constant 0 : index
    %14 = vector.load %arg5[%c0_7, %c0_8] : memref<8x128xf32, #tpu.memory_space<vmem>>, vector<8x128xf32>
    %15 = vector.broadcast %13 : vector<8x1xf32> to vector<8x128xf32>
    %16 = arith.subf %15, %7 : vector<8x128xf32>
    %17 = arith.mulf %4, %16 : vector<8x128xf32>
    %18 = arith.addf %14, %17 : vector<8x128xf32>
    %c0_9 = arith.constant 0 : index
    %c0_10 = arith.constant 0 : index
    %19 = vector.load %arg5[%c0_9, %c0_10] : memref<8x128xf32, #tpu.memory_space<vmem>>, vector<8x128xf32>
    tpu.vector_store %arg5[%c0_9, %c0_10], %18 {strides = array<i32>} : memref<8x128xf32, #tpu.memory_space<vmem>>, vector<8x128xf32>,
    %c0_i32_11 = arith.constant 0 : i32
    %20 = arith.cmpi eq, %arg1, %c0_i32_11 : i32
    %21 = arith.extui %20 : i1 to i32
    %c0_i32_12 = arith.constant 0 : i32
    %22 = arith.cmpi ne, %21, %c0_i32_12 : i32
    scf.if %22 {
      %c0_13 = arith.constant 0 : index
      %c0_14 = arith.constant 0 : index
      %23 = vector.load %arg5[%c0_13, %c0_14] : memref<8x128xf32, #tpu.memory_space<vmem>>, vector<8x128xf32>
      %24 = vector.shape_cast %23 : vector<8x128xf32> to vector<1x8x128xf32>
      %cst_15 = arith.constant dense<0.000000e+00> : vector<1xf32>
      %25 = vector.multi_reduction <add>, %24, %cst_15 [1, 2] : vector<1x8x128xf32> to vector<1xf32>
      %26 = vector.shape_cast %25 : vector<1xf32> to vector<1x1x1xf32>
      %27 = vector.extract %26[0, 0, 0] : f32 from vector<1x1x1xf32>
      %28 = vector.broadcast %27 : f32 to vector<1x8x128xf32>
      %c0_16 = arith.constant 0 : index
      %c0_17 = arith.constant 0 : index
      %c0_18 = arith.constant 0 : index
      %29 = vector.load %arg4[%c0_16, %c0_17, %c0_18] : memref<1x8x128xf32, #tpu.memory_space<vmem>>, vector<1x8x128xf32>
      tpu.vector_store %arg4[%c0_16, %c0_17, %c0_18], %28 {strides = array<i32>} : memref<1x8x128xf32, #tpu.memory_space<vmem>>, vector<1x8x128xf32>,
    } else {
    }
    return
  }
  func.func @transform_0(%arg0: i32, %arg1: i32) -> (i32, i32) {
    %c1_i32 = arith.constant 1 : i32
    %0 = arith.muli %arg0, %c1_i32 : i32
    %1 = arith.addi %0, %arg1 : i32
    %c0_i32 = arith.constant 0 : i32
    %c0_i32_0 = arith.constant 0 : i32
    return %1, %c0_i32 : i32, i32
  }
  func.func @transform_1(%arg0: i32, %arg1: i32) -> (i32, i32) {
    %c1_i32 = arith.constant 1 : i32
    %0 = arith.muli %arg0, %c1_i32 : i32
    %1 = arith.addi %0, %arg1 : i32
    %c0_i32 = arith.constant 0 : i32
    %c0_i32_0 = arith.constant 0 : i32
    return %1, %c0_i32 : i32, i32
  }
  func.func @transform_2(%arg0: i32, %arg1: i32) -> (i32, i32, i32) {
    %c0_i32 = arith.constant 0 : i32
    %c0_i32_0 = arith.constant 0 : i32
    %c0_i32_1 = arith.constant 0 : i32
    return %arg0, %c0_i32, %c0_i32_0 : i32, i32, i32
  }
}

</mosaic_0001>

<llo_original>
// kernel: tpu_custom_call.1
$region0: #{tpu_custom_call.1}
  #allocation0 [shape = 'u32[]', space=smem, size = 0x4, offset = 0x4, fixed_abs, tag = 'smem constant byte address 0x4 - core index']
  #allocation1 [shape = 'u32[144,128]{1,0:T(1,128)}', space=vmem, size = 0x12000, scoped, tag = 'internal scratch']
  #allocation2 [shape = 'f32[8,128]{1,0:T(8,128)}', space=vmem, size = 0x1000, scoped, tag = 'scratch operand']
  %s0 = inlined_call_operand.hbm [shape: f32[16,128], index: 0, kind: input, shape index: {}]
  %s1 = inlined_call_operand.hbm [shape: f32[16,128], index: 1, kind: input, shape index: {}]
  %s2 = inlined_call_operand.hbm [shape: f32[2,8,128], index: 2, kind: output, shape index: {}]
  %s3 = sld [smem:[#allocation0]]
  $region57: #{tpu_custom_call.1} parent=0
    _
  %s5 = ssub.s32 1, %s3
  %s6 = scalar_select 0, %s5, %s3
  $region1: #{tpu_custom_call.1} parent=0
    #allocation3 [shape = 'u8[8192]{0}', space=vmem, size = 0x2000, scoped, tag = 'input window, operand 0']
    #allocation4 [shape = 's32[2]{0}', space=sflag, size = 0x8, scoped, tag = 'scoped memory for tpu_custom_call.1']
    #allocation5 [shape = 's32[2]{0}', space=sflag, size = 0x8, scoped, tag = 'scoped memory for tpu_custom_call.1']
    #allocation6 [shape = 'u8[8192]{0}', space=vmem, size = 0x2000, scoped, tag = 'input window, operand 1']
    #allocation7 [shape = 's32[2]{0}', space=sflag, size = 0x8, scoped, tag = 'scoped memory for tpu_custom_call.1']
    #allocation8 [shape = 'u8[8192]{0}', space=vmem, size = 0x2000, scoped, tag = 'output window, operand 0']
    %7 = vsyncpa [#allocation4], 0
    %s8 = scalar_lea.sflag [#allocation4], 1
    %9 = vsyncpa %s8, 0
    %10 = vsyncpa [#allocation7], 0
    %s11 = scalar_lea.sflag [#allocation7], 1
    %12 = vsyncpa %s11, 0
    %13 = vsyncpa [#allocation5], 0
    %s14 = scalar_lea.sflag [#allocation5], 1
    %15 = vsyncpa %s14, 0
    loop: start=0, step=1, limit=4
    $region2: #{tpu_custom_call.1} parent=1 // loop_pre_header
      _
    $region3: #{tpu_custom_call.1} parent=1 // loop_header
      %s17 = sphi 0, %s21
      %p18 = scmp.ge.s32.totalorder %s17, 4
      %s24 = sphi 0, %s36
      %s25 = sphi 0, %s32
      %s26 = sphi 0, %s24
      %s27 = sphi 0, %s25
      %s28 = sphi 0, %s26
      %s29 = sphi 0, %s27
      %s41 = sphi 0, %s43
      %s44 = sphi 0, %s41
      %s45 = sphi 0, %s44
      %s61 = sphi 0, %s45
      %s69 = sphi 0, %s71
      %s72 = sphi 0, %s69
      %s73 = sphi 0, %s72
      %s89 = sphi 0, %s73
      %s95 = sphi 0, %s97
      %s98 = sphi 0, %s95
      %s99 = sphi 0, %s98
      %s115 = sphi 0, %s99
    $region4: #{tpu_custom_call.1} parent=1 // loop_header_branch
      %20 = sbr.rel (%p18) target = $region8
    $region5: #{tpu_custom_call.1} parent=1 // loop_body
      %s22 = ssub.s32 %s17, 1
      %s23 = ssub.s32 %s17, 2
      %s30 = sadd.s32 1, %s25
      %p31 = scmp.ge.s32.totalorder %s30, 1
      %s32 = scalar_select %p31, 0, %s30
      %s33 = sadd.s32 1, %s24
      %s34 = scalar_select %p31, %s33, %s24
      %p35 = scmp.ge.s32.totalorder %s34, 2
      %s36 = scalar_select %p35, 0, %s34
      %s37 = sadd.s32 %s24, %s25
      %s38 = sadd.s32 %s36, %s32
      %s39 = ssub.s32 %s37, %s38
      %p40 = scmp.eq.s32.totalorder %s39, 0
      %s42 = sadd.s32 %s41, 1
      %s43 = scalar_select %p40, %s41, %s42
      %p46 = pneg %p40
      %p47 = scmp.eq.s32.totalorder %s17, 1
      %p48 = por %p46, %p47
      %p49 = scmp.ne.s32.totalorder %s41, %s44
      %p50 = scmp.eq.s32.totalorder %s17, 0
      %p51 = por %p49, %p50
      %p52 = scmp.ne.s32.totalorder %s41, %s44
      %p53 = scmp.eq.s32.totalorder %s22, 1
      %p54 = por %p52, %p53
      %p55 = scmp.ne.s32.totalorder %s44, %s45
      %p56 = scmp.eq.s32.totalorder %s22, 0
      %p57 = por %p55, %p56
      %p58 = scmp.ne.s32.totalorder %s44, %s45
      %p59 = scmp.eq.s32.totalorder %s23, 1
      %p60 = por %p58, %p59
      %p62 = scmp.ne.s32.totalorder %s45, %s61
      %p63 = scmp.eq.s32.totalorder %s23, 0
      %p64 = por %p62, %p63
      %s65 = sadd.s32 %s24, %s25
      %s66 = sadd.s32 %s36, %s32
      %s67 = ssub.s32 %s65, %s66
      %p68 = scmp.eq.s32.totalorder %s67, 0
      %s70 = sadd.s32 %s69, 1
      %s71 = scalar_select %p68, %s69, %s70
      %p74 = pneg %p68
      %p75 = scmp.eq.s32.totalorder %s17, 1
      %p76 = por %p74, %p75
      %p77 = scmp.ne.s32.totalorder %s69, %s72
      %p78 = scmp.eq.s32.totalorder %s17, 0
      %p79 = por %p77, %p78
      %p80 = scmp.ne.s32.totalorder %s69, %s72
      %p81 = scmp.eq.s32.totalorder %s22, 1
      %p82 = por %p80, %p81
      %p83 = scmp.ne.s32.totalorder %s72, %s73
      %p84 = scmp.eq.s32.totalorder %s22, 0
      %p85 = por %p83, %p84
      %p86 = scmp.ne.s32.totalorder %s72, %s73
      %p87 = scmp.eq.s32.totalorder %s23, 1
      %p88 = por %p86, %p87
      %p90 = scmp.ne.s32.totalorder %s73, %s89
      %p91 = scmp.eq.s32.totalorder %s23, 0
      %p92 = por %p90, %p91
      %s93 = ssub.s32 %s24, %s36
      %p94 = scmp.eq.s32.totalorder %s93, 0
      %s96 = sadd.s32 %s95, 1
      %s97 = scalar_select %p94, %s95, %s96
      %p100 = pneg %p94
      %p101 = scmp.eq.s32.totalorder %s17, 1
      %p102 = por %p100, %p101
      %p103 = scmp.ne.s32.totalorder %s95, %s98
      %p104 = scmp.eq.s32.totalorder %s17, 0
      %p105 = por %p103, %p104
      %p106 = scmp.ne.s32.totalorder %s95, %s98
      %p107 = scmp.eq.s32.totalorder %s22, 1
      %p108 = por %p106, %p107
      %p109 = scmp.ne.s32.totalorder %s98, %s99
      %p110 = scmp.eq.s32.totalorder %s22, 0
      %p111 = por %p109, %p110
      %p112 = scmp.ne.s32.totalorder %s98, %s99
      %p113 = scmp.eq.s32.totalorder %s23, 1
      %p114 = por %p112, %p113
      %p116 = scmp.ne.s32.totalorder %s99, %s115
      %p117 = scmp.eq.s32.totalorder %s23, 0
      %p118 = por %p116, %p117
      %p119 = scmp.le.s32.totalorder 1, %s17
      %p120 = scmp.lt.s32.totalorder %s17, 3
      %p121 = pnand %p119, %p120
      %p122 = pneg %p121
      // Predicated region
      $region9: #{tpu_custom_call.1} parent=5 // pred_check
        _
      $region10: #{tpu_custom_call.1} parent=5 // pred_check_branch
        %124 = sbr.rel (%p121) target = $region12
      $region11: #{tpu_custom_call.1} parent=5 // pred_region
        %s125 = ssub.s32 %s17, 1
      $region12: #{tpu_custom_call.1} parent=5 // pred_fallthru
        _
      %p126 = scmp.lt.s32.totalorder %s17, 2
      // Predicated region
      $region13: #{tpu_custom_call.1} parent=5 // pred_check
        %p127 = pneg %p126
      $region14: #{tpu_custom_call.1} parent=5 // pred_check_branch
        %129 = sbr.rel (%p127) target = $region16
      $region15: #{tpu_custom_call.1} parent=5 // pred_region
        // Predicated region
        $region17: #{tpu_custom_call.1} parent=15 // pred_check
          %p130 = pneg %p51
        $region18: #{tpu_custom_call.1} parent=15 // pred_check_branch
          %132 = sbr.rel (%p130) target = $region20
        $region19: #{tpu_custom_call.1} parent=15 // pred_region
          %s133 = sand.u32 %s41, 1
          %s134 = scalar_lea.sflag [#allocation4], %s133
          %s135 = sand.u32 %s41, 1
          %s136 = smul.addr %s135, 8
          %s137 = scalar_lea.vmem [#allocation3], %s136
          %s138 = sadd.s32 %s24, %s25
          %s140 = ssub.s32 128, 128
          %141 = vsyncadd %s134, %s140
          %s142 = smul.addr %s138, 128
          %s143 = scalar_lea.hbm %s0, %s142
          %s145 = sshll.u32 %s137, 4
          %s146 = int_to_ptr.vmem [resolvable:$true] %s145
          %148 = dma.hbm_to_vmem [thread:$0]  %s143, 128, %s146, %s134
        $region20: #{tpu_custom_call.1} parent=15 // pred_fallthru
          _
        // Predicated region
        $region21: #{tpu_custom_call.1} parent=15 // pred_check
          %p149 = pneg %p79
        $region22: #{tpu_custom_call.1} parent=15 // pred_check_branch
          %151 = sbr.rel (%p149) target = $region24
        $region23: #{tpu_custom_call.1} parent=15 // pred_region
          %s152 = sand.u32 %s69, 1
          %s153 = scalar_lea.sflag [#allocation7], %s152
          %s154 = sand.u32 %s69, 1
          %s155 = smul.addr %s154, 8
          %s156 = scalar_lea.vmem [#allocation6], %s155
          %s157 = sadd.s32 %s24, %s25
          %s159 = ssub.s32 128, 128
          %160 = vsyncadd %s153, %s159
          %s161 = smul.addr %s157, 128
          %s162 = scalar_lea.hbm %s1, %s161
          %s164 = sshll.u32 %s156, 4
          %s165 = int_to_ptr.vmem [resolvable:$true] %s164
          %167 = dma.hbm_to_vmem [thread:$0]  %s162, 128, %s165, %s153
        $region24: #{tpu_custom_call.1} parent=15 // pred_fallthru
          _
      $region16: #{tpu_custom_call.1} parent=5 // pred_fallthru
        _
      %p168 = scmp.le.s32.totalorder 1, %s17
      %p169 = scmp.lt.s32.totalorder %s17, 3
      %p170 = pnand %p168, %p169
      %p171 = pneg %p170
      // Predicated region
      $region25: #{tpu_custom_call.1} parent=5 // pred_check
        _
      $region26: #{tpu_custom_call.1} parent=5 // pred_check_branch
        %173 = sbr.rel (%p170) target = $region28
      $region27: #{tpu_custom_call.1} parent=5 // pred_region
        %s174 = ssub.s32 %s17, 1
        %s175 = sand.u32 %s44, 1
        %s176 = scalar_lea.sflag [#allocation4], %s175
        %s177 = sand.u32 %s44, 1
        %s178 = smul.addr %s177, 8
        %s179 = scalar_lea.vmem [#allocation3], %s178
        // Predicated region
        $region29: #{tpu_custom_call.1} parent=27 // pred_check
          %p180 = pneg %p57
        $region30: #{tpu_custom_call.1} parent=27 // pred_check_branch
          %182 = sbr.rel (%p180) target = $region32
        $region31: #{tpu_custom_call.1} parent=27 // pred_region
          %183 = dma.done %s176, 128
        $region32: #{tpu_custom_call.1} parent=27 // pred_fallthru
          _
        %s184 = sand.u32 %s72, 1
        %s185 = scalar_lea.sflag [#allocation7], %s184
        %s186 = sand.u32 %s72, 1
        %s187 = smul.addr %s186, 8
        %s188 = scalar_lea.vmem [#allocation6], %s187
        // Predicated region
        $region33: #{tpu_custom_call.1} parent=27 // pred_check
          %p189 = pneg %p85
        $region34: #{tpu_custom_call.1} parent=27 // pred_check_branch
          %191 = sbr.rel (%p189) target = $region36
        $region35: #{tpu_custom_call.1} parent=27 // pred_region
          %192 = dma.done %s185, 128
        $region36: #{tpu_custom_call.1} parent=27 // pred_fallthru
          _
        %s193 = sand.u32 %s44, 1
        %s194 = scalar_lea.sflag [#allocation4], %s193
        %s195 = sand.u32 %s44, 1
        %s196 = smul.addr %s195, 8
        %s197 = scalar_lea.vmem [#allocation3], %s196
        %p198 = pneg %p57
        %p199 = pneg %p54
        %s200 = sand.u32 %s72, 1
        %s201 = scalar_lea.sflag [#allocation7], %s200
        %s202 = sand.u32 %s72, 1
        %s203 = smul.addr %s202, 8
        %s204 = scalar_lea.vmem [#allocation6], %s203
        %p205 = pneg %p85
        %p206 = pneg %p82
        %p207 = pneg %p111
        %p208 = pneg %p108
        %s209 = sand.u32 %s98, 1
        %s210 = scalar_lea.sflag [#allocation5], %s209
        %s211 = sand.u32 %s98, 1
        %s212 = smul.addr %s211, 8
        %s213 = scalar_lea.vmem [#allocation8], %s212
        %s214 = sadd.s32 %s26, %s27
        %s215 = sadd.s32 %s26, %s27
        %p216 = scmp.eq.s32.totalorder %s27, 0
        // Predicated region
        $region37: #{tpu_custom_call.1} parent=27 // pred_check
          %p217 = pneg %p216
        $region38: #{tpu_custom_call.1} parent=27 // pred_check_branch
          %219 = sbr.rel (%p217) target = $region40
        $region39: #{tpu_custom_call.1} parent=27 // pred_region
          %220 = vst [vmem:[#allocation2] sm:$0xff] 0.0
        $region40: #{tpu_custom_call.1} parent=27 // pred_fallthru
          _
        %v221 = vld [vmem:[%s179] sm:$0xff]
        %v222 = vld [vmem:[%s188] sm:$0xff]
        %v223 = vadd.f32 %v221, 1e-08
        %v224 = vlog2.pop %v223
        %v225 = vmul.f32 %v224, 0.6931472
        %226 = vadd.xlane.f32.xlu0 %v221
        %v227 = vpop.xlane.xlu0 %226
        %v228 = vadd.f32 %v227, 3.2e-07
        %v229 = vlog2.pop %v228
        %v230 = vmul.f32 %v229, 0.6931472
        %v231 = vld [vmem:[#allocation2] sm:$0xff]
        %v232 = vsub.f32 %v230, %v225
        %v233 = vmul.f32 %v222, %v232
        %v234 = vadd.f32 %v231, %v233
        %235 = vst [vmem:[#allocation2] sm:$0xff] %v234
        // Predicated region
        $region41: #{tpu_custom_call.1} parent=27 // pred_check
          %p236 = pneg %p216
        $region42: #{tpu_custom_call.1} parent=27 // pred_check_branch
          %238 = sbr.rel (%p236) target = $region44
        $region43: #{tpu_custom_call.1} parent=27 // pred_region
          %v239 = vld [vmem:[#allocation2] sm:$0xff]
          %240 = vadd.xlane.f32.xlu0 %v239
          %v241 = vpop.xlane.xlu0 %240
          %v242 = vrot.slane %v241, 4
          %v243 = vadd.f32 %v241, %v242
          %v244 = vrot.slane %v243, 2
          %v245 = vadd.f32 %v243, %v244
          %v246 = vrot.slane %v245, 1
          %v247 = vadd.f32 %v245, %v246
          %s248 = vtos %v247
          %v249 = vstv %s248
          %250 = vst [vmem:[%s213] sm:$0xff] %v249
        $region44: #{tpu_custom_call.1} parent=27 // pred_fallthru
          _
        %s251 = sand.u32 %s98, 1
        %s252 = scalar_lea.sflag [#allocation5], %s251
        %s253 = sand.u32 %s98, 1
        %s254 = smul.addr %s253, 8
        %s255 = scalar_lea.vmem [#allocation8], %s254
        // Predicated region
        $region45: #{tpu_custom_call.1} parent=27 // pred_check
          %p256 = pneg %p108
        $region46: #{tpu_custom_call.1} parent=27 // pred_check_branch
          %258 = sbr.rel (%p256) target = $region48
        $region47: #{tpu_custom_call.1} parent=27 // pred_region
          %s260 = ssub.s32 128, 128
          %261 = vsyncadd %s252, %s260
          %s262 = smul.addr %s26, 128
          %s263 = scalar_lea.hbm %s2, %s262
          %s265 = sshll.u32 %s255, 4
          %s266 = int_to_ptr.vmem [resolvable:$true] %s265
          %268 = dma.vmem_to_hbm [thread:$0]  %s266, 128, %s263, %s252
        $region48: #{tpu_custom_call.1} parent=27 // pred_fallthru
          _
      $region28: #{tpu_custom_call.1} parent=5 // pred_fallthru
        _
      %p269 = scmp.le.s32.totalorder 2, %s17
      // Predicated region
      $region49: #{tpu_custom_call.1} parent=5 // pred_check
        %p270 = pneg %p269
      $region50: #{tpu_custom_call.1} parent=5 // pred_check_branch
        %272 = sbr.rel (%p270) target = $region52
      $region51: #{tpu_custom_call.1} parent=5 // pred_region
        %s273 = ssub.s32 %s17, 2
        // Predicated region
        $region53: #{tpu_custom_call.1} parent=51 // pred_check
          %p274 = pneg %p114
        $region54: #{tpu_custom_call.1} parent=51 // pred_check_branch
          %276 = sbr.rel (%p274) target = $region56
        $region55: #{tpu_custom_call.1} parent=51 // pred_region
          %s277 = sand.u32 %s99, 1
          %s278 = scalar_lea.sflag [#allocation5], %s277
          %s279 = sand.u32 %s99, 1
          %s280 = smul.addr %s279, 8
          %s281 = scalar_lea.vmem [#allocation8], %s280
          %282 = dma.done %s278, 128
        $region56: #{tpu_custom_call.1} parent=51 // pred_fallthru
          _
      $region52: #{tpu_custom_call.1} parent=5 // pred_fallthru
        _
    $region6: #{tpu_custom_call.1} parent=1 // loop_footer
      %s21 = sadd.s32 1, %s17
    $region7: #{tpu_custom_call.1} parent=1 // loop_footer_branch
      %16 = sbr.rel target = $region3
    $region8: #{tpu_custom_call.1} parent=1 // loop_exit
      _
    %283 = vsyncpa [#allocation4], 1
    %s284 = scalar_lea.sflag [#allocation4], 1
    %285 = vsyncpa %s284, 1
    %286 = vsyncpa [#allocation7], 1
    %s287 = scalar_lea.sflag [#allocation7], 1
    %288 = vsyncpa %s287, 1
    %289 = vsyncpa [#allocation5], 1
    %s290 = scalar_lea.sflag [#allocation5], 1
    %291 = vsyncpa %s290, 1

</llo_original>
